<compile_context>
chip_gen: v5e
topology: v5e:2x2
jax: 0.10.0
libtpu: 0.0.40
codegen_flags: <defaults>
</compile_context>

<pallas_src>
import math
import functools

import jax
import jax.numpy as jnp
import numpy as np
from jax.experimental import pallas as pl
from jax.experimental.pallas import tpu as pltpu


def _pick_batch_block(batch, seq_q, row_target=256):
    """Batch elements per grid step.

    Prefer processing the whole batch in one step when it is small (fills the
    MXU M dimension, avoids pure-overhead grid steps); otherwise pick a
    divisor of `batch` that is a multiple of 8 (keeps the (TB, 1) valid-length
    BlockSpec tiling-legal).
    """
    if batch * seq_q <= row_target:
        return batch
    tb = max(8, (row_target // max(seq_q, 1)) // 8 * 8)
    while tb > 8 and batch % tb:
        tb -= 8
    return tb if batch % tb == 0 else batch


def _mha_kernel(q_ref, k_ref, v_ref, vlen_ref,          # (TB,S,D) tiles + (TB,1) lens
                wq_ref, wk_ref, wv_ref, wo_ref,         # full weight matrices
                o_ref,                                  # (TB, Sq, H) output tile
                *, num_heads):
    tb, sq, dq = q_ref.shape
    _, sk, dk = k_ref.shape
    dv = v_ref.shape[2]
    hidden = wq_ref.shape[1]
    hd = hidden // num_heads
    scale = 1.0 / math.sqrt(hd)

    # ---- Input projections, batched over the whole block (M = TB*S rows). ----
    qf = q_ref[...].reshape(tb * sq, dq)
    kf = k_ref[...].reshape(tb * sk, dk)
    vf = v_ref[...].reshape(tb * sk, dv)

    # Fold the 1/sqrt(hd) scale into q once (instead of per-head score scaling).
    q = jnp.dot(qf, wq_ref[...], preferred_element_type=jnp.float32) * scale
    k = jnp.dot(kf, wk_ref[...], preferred_element_type=jnp.float32)
    v = jnp.dot(vf, wv_ref[...], preferred_element_type=jnp.float32)

    q3 = q.reshape(tb, sq, hidden)
    k3 = k.reshape(tb, sk, hidden)
    v3 = v.reshape(tb, sk, hidden)

    # ---- Key-position mask: identical for every head/query row; hoisted. ----
    vlen = vlen_ref[...]                                         # (TB, 1) int32
    col = jax.lax.broadcasted_iota(jnp.int32, (tb, sq, sk), 2)
    vlen3 = jax.lax.broadcast_in_dim(vlen, (tb, sq, sk), (0, 2))
    keep = col < vlen3

    # ---- Per-head scaled dot-product attention (batched over TB). ----------
    outs = []
    for h in range(num_heads):        # static unroll; num_heads is small (<=8)
        qh = q3[:, :, h * hd:(h + 1) * hd]
        kh = k3[:, :, h * hd:(h + 1) * hd]
        vh = v3[:, :, h * hd:(h + 1) * hd]

        # scores[b, i, j] = sum_d qh[b,i,d] * kh[b,j,d]   (no explicit .T)
        scores = jax.lax.dot_general(
            qh, kh, (((2,), (2,)), ((0,), (0,))),
            preferred_element_type=jnp.float32)
        # sequence_mask: masked positions set to exactly -1e6 (not additive).
        scores = jnp.where(keep, scores, jnp.float32(-1000000.0))

        m = jnp.max(scores, axis=-1, keepdims=True)
        e = jnp.exp(scores - m)
        denom = jnp.sum(e, axis=-1, keepdims=True)
        attn = e * pl.reciprocal(denom, approx=True)     # EUP; frees VALU slots

        # out_h[b, i, d] = sum_j attn[b,i,j] * vh[b,j,d]
        outs.append(jax.lax.dot_general(
            attn, vh, (((2,), (1,)), ((0,), (0,))),
            preferred_element_type=jnp.float32))

    # Head concat stays in registers (no VMEM scratch / masked partial stores).
    concat = jnp.concatenate(outs, axis=-1).reshape(tb * sq, hidden)

    # ---- Output projection W_o. --------------------------------------------
    out = jnp.dot(concat.astype(wo_ref.dtype), wo_ref[...],
                  preferred_element_type=jnp.float32)
    o_ref[...] = out.reshape(tb, sq, hidden).astype(o_ref.dtype)


def multi_head_attention(queries, keys, values, valid_lens,
                         wq, wk, wv, wo, num_heads):
    """Pallas MultiHeadAttention.forward.

    queries: (B, Sq, Dq), keys: (B, Sk, Dk), values: (B, Sk, Dv)
    valid_lens: (B,) int; w*: (D_in, num_hiddens) with x @ W convention.
    Returns (B, Sq, num_hiddens) in the input dtype (fp32 accumulation inside).
    """
    B, Sq, Dq = queries.shape
    _, Sk, Dk = keys.shape
    _, _, Dv = values.shape
    H = wq.shape[1]

    TB = _pick_batch_block(B, Sq)
    assert B % TB == 0, "batch block must divide batch"
    grid = (B // TB,)

    valid2d = valid_lens.reshape(B, 1).astype(jnp.int32)

    kernel = functools.partial(_mha_kernel, num_heads=num_heads)

    grid_spec = pltpu.PrefetchScalarGridSpec(
        num_scalar_prefetch=0,
        grid=grid,
        in_specs=[
            pl.BlockSpec((TB, Sq, Dq), lambda i: (i, 0, 0)),
            pl.BlockSpec((TB, Sk, Dk), lambda i: (i, 0, 0)),
            pl.BlockSpec((TB, Sk, Dv), lambda i: (i, 0, 0)),
            pl.BlockSpec((TB, 1), lambda i: (i, 0)),
            # Weights: constant index_map (resident across the grid). For large
            # H on v7x one would add pipeline_mode=pl.Buffered(1) to single-
            # buffer them; at these sizes the default is fine.
            pl.BlockSpec((Dq, H), lambda i: (0, 0)),
            pl.BlockSpec((Dk, H), lambda i: (0, 0)),
            pl.BlockSpec((Dv, H), lambda i: (0, 0)),
            pl.BlockSpec((H, H), lambda i: (0, 0)),
        ],
        out_specs=pl.BlockSpec((TB, Sq, H), lambda i: (i, 0, 0)),
    )

    return pl.pallas_call(
        kernel,
        out_shape=jax.ShapeDtypeStruct((B, Sq, H), queries.dtype),
        grid_spec=grid_spec,
        compiler_params=pltpu.CompilerParams(
            dimension_semantics=("parallel",),     # megacore on v7x
            vmem_limit_bytes=32 * 1024 * 1024),    # explicit VMEM budget
    )(queries, keys, values, valid2d, wq, wk, wv, wo)


def _mha_reference(queries, keys, values, valid_lens, wq, wk, wv, wo, num_heads):
    """Pure-JAX reference mirroring the PyTorch module semantics."""
    B, Sq, _ = queries.shape
    q = queries @ wq
    k = keys @ wk
    v = values @ wv
    H = q.shape[-1]
    hd = H // num_heads

    def split_heads(x):                     # transpose_qkv
        b, s, _ = x.shape
        x = x.reshape(b, s, num_heads, hd).transpose(0, 2, 1, 3)
        return x.reshape(b * num_heads, s, hd)

    qh, kh, vh = split_heads(q), split_heads(k), split_heads(v)
    scores = jnp.einsum('bqd,bkd->bqk', qh, kh) / math.sqrt(hd)

    vl = jnp.repeat(valid_lens, num_heads)  # repeat_interleave over heads
    keep = jnp.arange(scores.shape[-1])[None, None, :] < vl[:, None, None]
    scores = jnp.where(keep, scores, -1000000.0)
    attn = jax.nn.softmax(scores, axis=-1)

    out = jnp.einsum('bqk,bkd->bqd', attn, vh)
    out = out.reshape(B, num_heads, Sq, hd).transpose(0, 2, 1, 3)  # transpose_output
    out = out.reshape(B, Sq, H)
    return out @ wo


if __name__ == "__main__":
    # Small config consistent with the module: key_size = query_size =
    # value_size = num_hiddens = 32, num_heads = 4, batch = 2, seq = 8.
    B, Sq, Sk = 2, 8, 8
    D = 32          # query_size == key_size == value_size
    H = 32          # num_hiddens
    NUM_HEADS = 4

    key = jax.random.PRNGKey(0)
    kq, kk, kv, kwq, kwk, kwv, kwo = jax.random.split(key, 7)

    queries = jax.random.normal(kq, (B, Sq, D), dtype=jnp.float32)
    keys_in = jax.random.normal(kk, (B, Sk, D), dtype=jnp.float32)
    values_in = jax.random.normal(kv, (B, Sk, D), dtype=jnp.float32)
    valid_lens = jnp.array([3, 6], dtype=jnp.int32)

    # Deterministic "Linear" weights (bias=False), stored as (in, out).
    wq = jax.random.normal(kwq, (D, H), dtype=jnp.float32) * 0.1
    wk = jax.random.normal(kwk, (D, H), dtype=jnp.float32) * 0.1
    wv = jax.random.normal(kwv, (D, H), dtype=jnp.float32) * 0.1
    wo = jax.random.normal(kwo, (H, H), dtype=jnp.float32) * 0.1

    out = multi_head_attention(queries, keys_in, values_in, valid_lens,
                               wq, wk, wv, wo, NUM_HEADS)
    out = jax.block_until_ready(out)

    ref = _mha_reference(queries, keys_in, values_in, valid_lens,
                         wq, wk, wv, wo, NUM_HEADS)
    # Tolerance is set to cover the EUP approximate-reciprocal softmax
    # normalization (relative error ~1e-3); structural errors would be O(1).
    np.testing.assert_allclose(np.asarray(out), np.asarray(ref),
                               rtol=5e-3, atol=5e-3)

    # TODO(synk): dropout layers are identity in eval mode and are omitted.
    print("KERNEL_OK")
</pallas_src>

<mosaic_0001>
module attributes {stable_mosaic.version = 11 : i64} {
  func.func @_mha_kernel(%arg0: i32, %arg1: memref<2x8x32xf32, #tpu.memory_space<vmem>>, %arg2: memref<2x8x32xf32, #tpu.memory_space<vmem>>, %arg3: memref<2x8x32xf32, #tpu.memory_space<vmem>>, %arg4: memref<2x1xi32, #tpu.memory_space<vmem>>, %arg5: memref<32x32xf32, #tpu.memory_space<vmem>>, %arg6: memref<32x32xf32, #tpu.memory_space<vmem>>, %arg7: memref<32x32xf32, #tpu.memory_space<vmem>>, %arg8: memref<32x32xf32, #tpu.memory_space<vmem>>, %arg9: memref<2x8x32xf32, #tpu.memory_space<vmem>>) attributes {dimension_semantics = [#tpu.dimension_semantics<parallel>], iteration_bounds = array<i64: 1>, scalar_prefetch = 0 : i64, scratch_operands = 0 : i64, tpu.core_type = #tpu.core_type<tc>, window_params = [{transform_indices = @transform_0, window_bounds = array<i64: 2, 8, 32>}, {transform_indices = @transform_1, window_bounds = array<i64: 2, 8, 32>}, {transform_indices = @transform_2, window_bounds = array<i64: 2, 8, 32>}, {transform_indices = @transform_3, window_bounds = array<i64: 2, 1>}, {pipeline_mode = #tpu.pipeline_mode<synchronous>, transform_indices = @transform_4, window_bounds = array<i64: 32, 32>}, {pipeline_mode = #tpu.pipeline_mode<synchronous>, transform_indices = @transform_5, window_bounds = array<i64: 32, 32>}, {pipeline_mode = #tpu.pipeline_mode<synchronous>, transform_indices = @transform_6, window_bounds = array<i64: 32, 32>}, {pipeline_mode = #tpu.pipeline_mode<synchronous>, transform_indices = @transform_7, window_bounds = array<i64: 32, 32>}, {transform_indices = @transform_8, window_bounds = array<i64: 2, 8, 32>}]} {
    %c0 = arith.constant 0 : index
    %c0_0 = arith.constant 0 : index
    %c0_1 = arith.constant 0 : index
    %0 = vector.load %arg1[%c0, %c0_0, %c0_1] : memref<2x8x32xf32, #tpu.memory_space<vmem>>, vector<2x8x32xf32>
    %1 = vector.shape_cast %0 : vector<2x8x32xf32> to vector<16x32xf32>
    %c0_2 = arith.constant 0 : index
    %c0_3 = arith.constant 0 : index
    %c0_4 = arith.constant 0 : index
    %2 = vector.load %arg2[%c0_2, %c0_3, %c0_4] : memref<2x8x32xf32, #tpu.memory_space<vmem>>, vector<2x8x32xf32>
    %3 = vector.shape_cast %2 : vector<2x8x32xf32> to vector<16x32xf32>
    %c0_5 = arith.constant 0 : index
    %c0_6 = arith.constant 0 : index
    %c0_7 = arith.constant 0 : index
    %4 = vector.load %arg3[%c0_5, %c0_6, %c0_7] : memref<2x8x32xf32, #tpu.memory_space<vmem>>, vector<2x8x32xf32>
    %5 = vector.shape_cast %4 : vector<2x8x32xf32> to vector<16x32xf32>
    %c0_8 = arith.constant 0 : index
    %c0_9 = arith.constant 0 : index
    %6 = vector.load %arg5[%c0_8, %c0_9] : memref<32x32xf32, #tpu.memory_space<vmem>>, vector<32x32xf32>
    %cst = arith.constant dense<0.000000e+00> : vector<16x32xf32>
    %7 = tpu.matmul %1, %6, %cst {dimension_numbers = #tpu.dot_dimension_numbers<[1], [0], [0], [1], [0, 0, 1, 1], [], []>} : vector<16x32xf32>, vector<32x32xf32>, vector<16x32xf32> -> vector<16x32xf32>
    %cst_10 = arith.constant 0.353553385 : f32
    %8 = vector.broadcast %cst_10 : f32 to vector<16x32xf32>
    %9 = arith.mulf %7, %8 : vector<16x32xf32>
    %c0_11 = arith.constant 0 : index
    %c0_12 = arith.constant 0 : index
    %10 = vector.load %arg6[%c0_11, %c0_12] : memref<32x32xf32, #tpu.memory_space<vmem>>, vector<32x32xf32>
    %cst_13 = arith.constant dense<0.000000e+00> : vector<16x32xf32>
    %11 = tpu.matmul %3, %10, %cst_13 {dimension_numbers = #tpu.dot_dimension_numbers<[1], [0], [0], [1], [0, 0, 1, 1], [], []>} : vector<16x32xf32>, vector<32x32xf32>, vector<16x32xf32> -> vector<16x32xf32>
    %c0_14 = arith.constant 0 : index
    %c0_15 = arith.constant 0 : index
    %12 = vector.load %arg7[%c0_14, %c0_15] : memref<32x32xf32, #tpu.memory_space<vmem>>, vector<32x32xf32>
    %cst_16 = arith.constant dense<0.000000e+00> : vector<16x32xf32>
    %13 = tpu.matmul %5, %12, %cst_16 {dimension_numbers = #tpu.dot_dimension_numbers<[1], [0], [0], [1], [0, 0, 1, 1], [], []>} : vector<16x32xf32>, vector<32x32xf32>, vector<16x32xf32> -> vector<16x32xf32>
    %14 = vector.shape_cast %9 : vector<16x32xf32> to vector<2x8x32xf32>
    %15 = vector.shape_cast %11 : vector<16x32xf32> to vector<2x8x32xf32>
    %16 = vector.shape_cast %13 : vector<16x32xf32> to vector<2x8x32xf32>
    %c0_17 = arith.constant 0 : index
    %c0_18 = arith.constant 0 : index
    %17 = vector.load %arg4[%c0_17, %c0_18] : memref<2x1xi32, #tpu.memory_space<vmem>>, vector<2x1xi32>
    %18 = tpu.iota {dimensions = array<i32: 2>} : vector<2x8x8xi32>
    %19 = vector.shape_cast %17 : vector<2x1xi32> to vector<2x1x1xi32>
    %20 = vector.broadcast %19 : vector<2x1x1xi32> to vector<2x8x8xi32>
    %21 = arith.cmpi slt, %18, %20 : vector<2x8x8xi32>
    %22 = vector.extract_strided_slice %14 {offsets = [0, 0, 0], sizes = [2, 8, 8], strides = [1, 1, 1]} : vector<2x8x32xf32> to vector<2x8x8xf32>
    %23 = vector.extract_strided_slice %15 {offsets = [0, 0, 0], sizes = [2, 8, 8], strides = [1, 1, 1]} : vector<2x8x32xf32> to vector<2x8x8xf32>
    %24 = vector.extract_strided_slice %16 {offsets = [0, 0, 0], sizes = [2, 8, 8], strides = [1, 1, 1]} : vector<2x8x32xf32> to vector<2x8x8xf32>
    %cst_19 = arith.constant dense<0.000000e+00> : vector<2x8x8xf32>
    %25 = tpu.matmul %22, %23, %cst_19 {dimension_numbers = #tpu.dot_dimension_numbers<[2], [2], [1], [1], [0, 0, 0, 1, 1, 1], [0], [0]>} : vector<2x8x8xf32>, vector<2x8x8xf32>, vector<2x8x8xf32> -> vector<2x8x8xf32>
    %cst_20 = arith.constant -1.000000e+06 : f32
    %26 = vector.broadcast %cst_20 : f32 to vector<2x8x8xf32>
    %27 = arith.select %21, %25, %26 : vector<2x8x8xi1>, vector<2x8x8xf32>
    %cst_21 = arith.constant dense<0xFF800000> : vector<2x8xf32>
    %28 = vector.multi_reduction <maximumf>, %27, %cst_21 [2] : vector<2x8x8xf32> to vector<2x8xf32>
    %29 = vector.shape_cast %28 : vector<2x8xf32> to vector<2x8x1xf32>
    %30 = vector.broadcast %29 : vector<2x8x1xf32> to vector<2x8x8xf32>
    %31 = arith.subf %27, %30 : vector<2x8x8xf32>
    %32 = math.exp %31 : vector<2x8x8xf32>
    %cst_22 = arith.constant dense<0.000000e+00> : vector<2x8xf32>
    %33 = vector.multi_reduction <add>, %32, %cst_22 [2] : vector<2x8x8xf32> to vector<2x8xf32>
    %34 = vector.shape_cast %33 : vector<2x8xf32> to vector<2x8x1xf32>
    %35 = tpu.reciprocal %34 {approx = true} : vector<2x8x1xf32> -> vector<2x8x1xf32>
    %36 = vector.broadcast %35 : vector<2x8x1xf32> to vector<2x8x8xf32>
    %37 = arith.mulf %32, %36 : vector<2x8x8xf32>
    %cst_23 = arith.constant dense<0.000000e+00> : vector<2x8x8xf32>
    %38 = tpu.matmul %37, %24, %cst_23 {dimension_numbers = #tpu.dot_dimension_numbers<[2], [1], [1], [2], [0, 0, 0, 1, 1, 2], [0], [0]>} : vector<2x8x8xf32>, vector<2x8x8xf32>, vector<2x8x8xf32> -> vector<2x8x8xf32>
    %39 = vector.extract_strided_slice %14 {offsets = [0, 0, 8], sizes = [2, 8, 8], strides = [1, 1, 1]} : vector<2x8x32xf32> to vector<2x8x8xf32>
    %40 = vector.extract_strided_slice %15 {offsets = [0, 0, 8], sizes = [2, 8, 8], strides = [1, 1, 1]} : vector<2x8x32xf32> to vector<2x8x8xf32>
    %41 = vector.extract_strided_slice %16 {offsets = [0, 0, 8], sizes = [2, 8, 8], strides = [1, 1, 1]} : vector<2x8x32xf32> to vector<2x8x8xf32>
    %cst_24 = arith.constant dense<0.000000e+00> : vector<2x8x8xf32>
    %42 = tpu.matmul %39, %40, %cst_24 {dimension_numbers = #tpu.dot_dimension_numbers<[2], [2], [1], [1], [0, 0, 0, 1, 1, 1], [0], [0]>} : vector<2x8x8xf32>, vector<2x8x8xf32>, vector<2x8x8xf32> -> vector<2x8x8xf32>
    %cst_25 = arith.constant -1.000000e+06 : f32
    %43 = vector.broadcast %cst_25 : f32 to vector<2x8x8xf32>
    %44 = arith.select %21, %42, %43 : vector<2x8x8xi1>, vector<2x8x8xf32>
    %cst_26 = arith.constant dense<0xFF800000> : vector<2x8xf32>
    %45 = vector.multi_reduction <maximumf>, %44, %cst_26 [2] : vector<2x8x8xf32> to vector<2x8xf32>
    %46 = vector.shape_cast %45 : vector<2x8xf32> to vector<2x8x1xf32>
    %47 = vector.broadcast %46 : vector<2x8x1xf32> to vector<2x8x8xf32>
    %48 = arith.subf %44, %47 : vector<2x8x8xf32>
    %49 = math.exp %48 : vector<2x8x8xf32>
    %cst_27 = arith.constant dense<0.000000e+00> : vector<2x8xf32>
    %50 = vector.multi_reduction <add>, %49, %cst_27 [2] : vector<2x8x8xf32> to vector<2x8xf32>
    %51 = vector.shape_cast %50 : vector<2x8xf32> to vector<2x8x1xf32>
    %52 = tpu.reciprocal %51 {approx = true} : vector<2x8x1xf32> -> vector<2x8x1xf32>
    %53 = vector.broadcast %52 : vector<2x8x1xf32> to vector<2x8x8xf32>
    %54 = arith.mulf %49, %53 : vector<2x8x8xf32>
    %cst_28 = arith.constant dense<0.000000e+00> : vector<2x8x8xf32>
    %55 = tpu.matmul %54, %41, %cst_28 {dimension_numbers = #tpu.dot_dimension_numbers<[2], [1], [1], [2], [0, 0, 0, 1, 1, 2], [0], [0]>} : vector<2x8x8xf32>, vector<2x8x8xf32>, vector<2x8x8xf32> -> vector<2x8x8xf32>
    %56 = vector.extract_strided_slice %14 {offsets = [0, 0, 16], sizes = [2, 8, 8], strides = [1, 1, 1]} : vector<2x8x32xf32> to vector<2x8x8xf32>
    %57 = vector.extract_strided_slice %15 {offsets = [0, 0, 16], sizes = [2, 8, 8], strides = [1, 1, 1]} : vector<2x8x32xf32> to vector<2x8x8xf32>
    %58 = vector.extract_strided_slice %16 {offsets = [0, 0, 16], sizes = [2, 8, 8], strides = [1, 1, 1]} : vector<2x8x32xf32> to vector<2x8x8xf32>
    %cst_29 = arith.constant dense<0.000000e+00> : vector<2x8x8xf32>
    %59 = tpu.matmul %56, %57, %cst_29 {dimension_numbers = #tpu.dot_dimension_numbers<[2], [2], [1], [1], [0, 0, 0, 1, 1, 1], [0], [0]>} : vector<2x8x8xf32>, vector<2x8x8xf32>, vector<2x8x8xf32> -> vector<2x8x8xf32>
    %cst_30 = arith.constant -1.000000e+06 : f32
    %60 = vector.broadcast %cst_30 : f32 to vector<2x8x8xf32>
    %61 = arith.select %21, %59, %60 : vector<2x8x8xi1>, vector<2x8x8xf32>
    %cst_31 = arith.constant dense<0xFF800000> : vector<2x8xf32>
    %62 = vector.multi_reduction <maximumf>, %61, %cst_31 [2] : vector<2x8x8xf32> to vector<2x8xf32>
    %63 = vector.shape_cast %62 : vector<2x8xf32> to vector<2x8x1xf32>
    %64 = vector.broadcast %63 : vector<2x8x1xf32> to vector<2x8x8xf32>
    %65 = arith.subf %61, %64 : vector<2x8x8xf32>
    %66 = math.exp %65 : vector<2x8x8xf32>
    %cst_32 = arith.constant dense<0.000000e+00> : vector<2x8xf32>
    %67 = vector.multi_reduction <add>, %66, %cst_32 [2] : vector<2x8x8xf32> to vector<2x8xf32>
    %68 = vector.shape_cast %67 : vector<2x8xf32> to vector<2x8x1xf32>
    %69 = tpu.reciprocal %68 {approx = true} : vector<2x8x1xf32> -> vector<2x8x1xf32>
    %70 = vector.broadcast %69 : vector<2x8x1xf32> to vector<2x8x8xf32>
    %71 = arith.mulf %66, %70 : vector<2x8x8xf32>
    %cst_33 = arith.constant dense<0.000000e+00> : vector<2x8x8xf32>
    %72 = tpu.matmul %71, %58, %cst_33 {dimension_numbers = #tpu.dot_dimension_numbers<[2], [1], [1], [2], [0, 0, 0, 1, 1, 2], [0], [0]>} : vector<2x8x8xf32>, vector<2x8x8xf32>, vector<2x8x8xf32> -> vector<2x8x8xf32>
    %73 = vector.extract_strided_slice %14 {offsets = [0, 0, 24], sizes = [2, 8, 8], strides = [1, 1, 1]} : vector<2x8x32xf32> to vector<2x8x8xf32>
    %74 = vector.extract_strided_slice %15 {offsets = [0, 0, 24], sizes = [2, 8, 8], strides = [1, 1, 1]} : vector<2x8x32xf32> to vector<2x8x8xf32>
    %75 = vector.extract_strided_slice %16 {offsets = [0, 0, 24], sizes = [2, 8, 8], strides = [1, 1, 1]} : vector<2x8x32xf32> to vector<2x8x8xf32>
    %cst_34 = arith.constant dense<0.000000e+00> : vector<2x8x8xf32>
    %76 = tpu.matmul %73, %74, %cst_34 {dimension_numbers = #tpu.dot_dimension_numbers<[2], [2], [1], [1], [0, 0, 0, 1, 1, 1], [0], [0]>} : vector<2x8x8xf32>, vector<2x8x8xf32>, vector<2x8x8xf32> -> vector<2x8x8xf32>
    %cst_35 = arith.constant -1.000000e+06 : f32
    %77 = vector.broadcast %cst_35 : f32 to vector<2x8x8xf32>
    %78 = arith.select %21, %76, %77 : vector<2x8x8xi1>, vector<2x8x8xf32>
    %cst_36 = arith.constant dense<0xFF800000> : vector<2x8xf32>
    %79 = vector.multi_reduction <maximumf>, %78, %cst_36 [2] : vector<2x8x8xf32> to vector<2x8xf32>
    %80 = vector.shape_cast %79 : vector<2x8xf32> to vector<2x8x1xf32>
    %81 = vector.broadcast %80 : vector<2x8x1xf32> to vector<2x8x8xf32>
    %82 = arith.subf %78, %81 : vector<2x8x8xf32>
    %83 = math.exp %82 : vector<2x8x8xf32>
    %cst_37 = arith.constant dense<0.000000e+00> : vector<2x8xf32>
    %84 = vector.multi_reduction <add>, %83, %cst_37 [2] : vector<2x8x8xf32> to vector<2x8xf32>
    %85 = vector.shape_cast %84 : vector<2x8xf32> to vector<2x8x1xf32>
    %86 = tpu.reciprocal %85 {approx = true} : vector<2x8x1xf32> -> vector<2x8x1xf32>
    %87 = vector.broadcast %86 : vector<2x8x1xf32> to vector<2x8x8xf32>
    %88 = arith.mulf %83, %87 : vector<2x8x8xf32>
    %cst_38 = arith.constant dense<0.000000e+00> : vector<2x8x8xf32>
    %89 = tpu.matmul %88, %75, %cst_38 {dimension_numbers = #tpu.dot_dimension_numbers<[2], [1], [1], [2], [0, 0, 0, 1, 1, 2], [0], [0]>} : vector<2x8x8xf32>, vector<2x8x8xf32>, vector<2x8x8xf32> -> vector<2x8x8xf32>
    %90 = tpu.concatenate %38, %55, %72, %89 in 2 : vector<2x8x8xf32>, vector<2x8x8xf32>, vector<2x8x8xf32>, vector<2x8x8xf32> -> vector<2x8x32xf32>
    %91 = vector.shape_cast %90 : vector<2x8x32xf32> to vector<16x32xf32>
    %c0_39 = arith.constant 0 : index
    %c0_40 = arith.constant 0 : index
    %92 = vector.load %arg8[%c0_39, %c0_40] : memref<32x32xf32, #tpu.memory_space<vmem>>, vector<32x32xf32>
    %cst_41 = arith.constant dense<0.000000e+00> : vector<16x32xf32>
    %93 = tpu.matmul %91, %92, %cst_41 {dimension_numbers = #tpu.dot_dimension_numbers<[1], [0], [0], [1], [0, 0, 1, 1], [], []>} : vector<16x32xf32>, vector<32x32xf32>, vector<16x32xf32> -> vector<16x32xf32>
    %94 = vector.shape_cast %93 : vector<16x32xf32> to vector<2x8x32xf32>
    %c0_42 = arith.constant 0 : index
    %c0_43 = arith.constant 0 : index
    %c0_44 = arith.constant 0 : index
    %95 = vector.load %arg9[%c0_42, %c0_43, %c0_44] : memref<2x8x32xf32, #tpu.memory_space<vmem>>, vector<2x8x32xf32>
    tpu.vector_store %arg9[%c0_42, %c0_43, %c0_44], %94 {strides = array<i32>} : memref<2x8x32xf32, #tpu.memory_space<vmem>>, vector<2x8x32xf32>,
    return
  }
  func.func @transform_0(%arg0: i32) -> (i32, i32, i32) {
    %c0_i32 = arith.constant 0 : i32
    %c0_i32_0 = arith.constant 0 : i32
    %c0_i32_1 = arith.constant 0 : i32
    return %arg0, %c0_i32, %c0_i32_0 : i32, i32, i32
  }
  func.func @transform_1(%arg0: i32) -> (i32, i32, i32) {
    %c0_i32 = arith.constant 0 : i32
    %c0_i32_0 = arith.constant 0 : i32
    %c0_i32_1 = arith.constant 0 : i32
    return %arg0, %c0_i32, %c0_i32_0 : i32, i32, i32
  }
  func.func @transform_2(%arg0: i32) -> (i32, i32, i32) {
    %c0_i32 = arith.constant 0 : i32
    %c0_i32_0 = arith.constant 0 : i32
    %c0_i32_1 = arith.constant 0 : i32
    return %arg0, %c0_i32, %c0_i32_0 : i32, i32, i32
  }
  func.func @transform_3(%arg0: i32) -> (i32, i32) {
    %c0_i32 = arith.constant 0 : i32
    %c0_i32_0 = arith.constant 0 : i32
    return %arg0, %c0_i32 : i32, i32
  }
  func.func @transform_4(%arg0: i32) -> (i32, i32) {
    %c0_i32 = arith.constant 0 : i32
    %c0_i32_0 = arith.constant 0 : i32
    %c0_i32_1 = arith.constant 0 : i32
    return %c0_i32, %c0_i32_0 : i32, i32
  }
  func.func @transform_5(%arg0: i32) -> (i32, i32) {
    %c0_i32 = arith.constant 0 : i32
    %c0_i32_0 = arith.constant 0 : i32
    %c0_i32_1 = arith.constant 0 : i32
    return %c0_i32, %c0_i32_0 : i32, i32
  }
  func.func @transform_6(%arg0: i32) -> (i32, i32) {
    %c0_i32 = arith.constant 0 : i32
    %c0_i32_0 = arith.constant 0 : i32
    %c0_i32_1 = arith.constant 0 : i32
    return %c0_i32, %c0_i32_0 : i32, i32
  }
  func.func @transform_7(%arg0: i32) -> (i32, i32) {
    %c0_i32 = arith.constant 0 : i32
    %c0_i32_0 = arith.constant 0 : i32
    %c0_i32_1 = arith.constant 0 : i32
    return %c0_i32, %c0_i32_0 : i32, i32
  }
  func.func @transform_8(%arg0: i32) -> (i32, i32, i32) {
    %c0_i32 = arith.constant 0 : i32
    %c0_i32_0 = arith.constant 0 : i32
    %c0_i32_1 = arith.constant 0 : i32
    return %arg0, %c0_i32, %c0_i32_0 : i32, i32, i32
  }
}

</mosaic_0001>

<llo_original>
// kernel: tpu_custom_call.1
$region0: #{tpu_custom_call.1}
  #allocation0 [shape = 'u32[]', space=smem, size = 0x4, offset = 0x4, fixed_abs, tag = 'smem constant byte address 0x4 - core index']
  #allocation1 [shape = 'u32[72,128]{1,0:T(1,128)}', space=vmem, size = 0x9000, scoped, tag = 'internal scratch']
  %s0 = inlined_call_operand.hbm [shape: f32[2,8,32], index: 0, kind: input, shape index: {}]
  %s1 = inlined_call_operand.hbm [shape: f32[2,8,32], index: 1, kind: input, shape index: {}]
  %s2 = inlined_call_operand.hbm [shape: f32[2,8,32], index: 2, kind: input, shape index: {}]
  %s3 = inlined_call_operand.vmem [shape: s32[2,1], index: 3, kind: input, shape index: {}]
  %s4 = inlined_call_operand.hbm [shape: f32[32,32], index: 4, kind: input, shape index: {}]
  %s5 = inlined_call_operand.hbm [shape: f32[32,32], index: 5, kind: input, shape index: {}]
  %s6 = inlined_call_operand.hbm [shape: f32[32,32], index: 6, kind: input, shape index: {}]
  %s7 = inlined_call_operand.hbm [shape: f32[32,32], index: 7, kind: input, shape index: {}]
  %s8 = inlined_call_operand.hbm [shape: f32[2,8,32], index: 8, kind: output, shape index: {}]
  %s9 = sld [smem:[#allocation0]]
  $region70: #{tpu_custom_call.1} parent=0
    _
  %s11 = ssub.s32 1, %s9
  %s12 = scalar_select 0, %s11, %s9
  $region1: #{tpu_custom_call.1} parent=0
    #allocation2 [shape = 'u8[8192]{0}', space=vmem, size = 0x2000, scoped, tag = 'input window, operand 0, single buffered']
    #allocation3 [shape = 's32[1]{0}', space=sflag, size = 0x4, scoped, tag = 'scoped memory for tpu_custom_call.1']
    #allocation4 [shape = 's32[1]{0}', space=sflag, size = 0x4, scoped, tag = 'scoped memory for tpu_custom_call.1']
    #allocation5 [shape = 'u8[8192]{0}', space=vmem, size = 0x2000, scoped, tag = 'input window, operand 1, single buffered']
    #allocation6 [shape = 's32[1]{0}', space=sflag, size = 0x4, scoped, tag = 'scoped memory for tpu_custom_call.1']
    #allocation7 [shape = 'u8[8192]{0}', space=vmem, size = 0x2000, scoped, tag = 'input window, operand 2, single buffered']
    #allocation8 [shape = 'u8[16384]{0}', space=vmem, size = 0x4000, scoped, tag = 'input window, operand 4, single buffered']
    #allocation9 [shape = 's32[1]{0}', space=sflag, size = 0x4, scoped, tag = 'scoped memory for tpu_custom_call.1']
    #allocation10 [shape = 'u8[16384]{0}', space=vmem, size = 0x4000, scoped, tag = 'input window, operand 5, single buffered']
    #allocation11 [shape = 'u8[16384]{0}', space=vmem, size = 0x4000, scoped, tag = 'input window, operand 6, single buffered']
    #allocation12 [shape = 's32[1]{0}', space=sflag, size = 0x4, scoped, tag = 'scoped memory for tpu_custom_call.1']
    #allocation13 [shape = 'u8[16384]{0}', space=vmem, size = 0x4000, scoped, tag = 'input window, operand 7, single buffered']
    #allocation14 [shape = 'u8[8192]{0}', space=vmem, size = 0x2000, scoped, tag = 'output window, operand 0, single buffered']
    %13 = vsyncpa [#allocation3], 0
    %14 = vsyncpa [#allocation6], 0
    %15 = vsyncpa [#allocation9], 0
    %16 = vsyncpa [#allocation12], 0
    %17 = vsyncpa [#allocation4], 0
    // Predicated region
    $region2: #{tpu_custom_call.1} parent=1 // pred_check
      _
    $region3: #{tpu_custom_call.1} parent=1 // pred_check_branch
      %19 = sbr.rel (0) target = $region5
    $region4: #{tpu_custom_call.1} parent=1 // pred_region
      %21 = vsyncadd [#allocation3], 0
      %s22 = sshll.u32 %s0, 4
      %s23 = int_to_ptr.hbm [resolvable:$true] %s22
      %s24 = sshll.u32 [#allocation2], 4
      %s25 = int_to_ptr.vmem [resolvable:$true] %s24
      %30 = dma.hbm_to_vmem [thread:$0]  %s23, 256, %s25, [#allocation3], 128, 128, 8
    $region5: #{tpu_custom_call.1} parent=1 // pred_fallthru
      _
    // Predicated region
    $region6: #{tpu_custom_call.1} parent=1 // pred_check
      _
    $region7: #{tpu_custom_call.1} parent=1 // pred_check_branch
      %32 = sbr.rel (0) target = $region9
    $region8: #{tpu_custom_call.1} parent=1 // pred_region
      %34 = vsyncadd [#allocation6], 0
      %s35 = sshll.u32 %s1, 4
      %s36 = int_to_ptr.hbm [resolvable:$true] %s35
      %s37 = sshll.u32 [#allocation5], 4
      %s38 = int_to_ptr.vmem [resolvable:$true] %s37
      %43 = dma.hbm_to_vmem [thread:$0]  %s36, 256, %s38, [#allocation6], 128, 128, 8
    $region9: #{tpu_custom_call.1} parent=1 // pred_fallthru
      _
    // Predicated region
    $region10: #{tpu_custom_call.1} parent=1 // pred_check
      _
    $region11: #{tpu_custom_call.1} parent=1 // pred_check_branch
      %45 = sbr.rel (0) target = $region13
    $region12: #{tpu_custom_call.1} parent=1 // pred_region
      %47 = vsyncadd [#allocation6], 0
      %s48 = sshll.u32 %s2, 4
      %s49 = int_to_ptr.hbm [resolvable:$true] %s48
      %s50 = sshll.u32 [#allocation7], 4
      %s51 = int_to_ptr.vmem [resolvable:$true] %s50
      %56 = dma.hbm_to_vmem [thread:$0]  %s49, 256, %s51, [#allocation6], 128, 128, 8
    $region13: #{tpu_custom_call.1} parent=1 // pred_fallthru
      _
    // Predicated region
    $region14: #{tpu_custom_call.1} parent=1 // pred_check
      _
    $region15: #{tpu_custom_call.1} parent=1 // pred_check_branch
      %58 = sbr.rel (0) target = $region17
    $region16: #{tpu_custom_call.1} parent=1 // pred_region
      _
    $region17: #{tpu_custom_call.1} parent=1 // pred_fallthru
      _
    // Predicated region
    $region18: #{tpu_custom_call.1} parent=1 // pred_check
      _
    $region19: #{tpu_custom_call.1} parent=1 // pred_check_branch
      %60 = sbr.rel (0) target = $region21
    $region20: #{tpu_custom_call.1} parent=1 // pred_region
      %62 = vsyncadd [#allocation9], 0
      %s63 = sshll.u32 %s4, 4
      %s64 = int_to_ptr.hbm [resolvable:$true] %s63
      %s65 = sshll.u32 [#allocation8], 4
      %s66 = int_to_ptr.vmem [resolvable:$true] %s65
      %71 = dma.hbm_to_vmem [thread:$0]  %s64, 512, %s66, [#allocation9], 128, 128, 8
    $region21: #{tpu_custom_call.1} parent=1 // pred_fallthru
      _
    // Predicated region
    $region22: #{tpu_custom_call.1} parent=1 // pred_check
      _
    $region23: #{tpu_custom_call.1} parent=1 // pred_check_branch
      %73 = sbr.rel (0) target = $region25
    $region24: #{tpu_custom_call.1} parent=1 // pred_region
      %75 = vsyncadd [#allocation9], 0
      %s76 = sshll.u32 %s5, 4
      %s77 = int_to_ptr.hbm [resolvable:$true] %s76
      %s78 = sshll.u32 [#allocation10], 4
      %s79 = int_to_ptr.vmem [resolvable:$true] %s78
      %84 = dma.hbm_to_vmem [thread:$0]  %s77, 512, %s79, [#allocation9], 128, 128, 8
    $region25: #{tpu_custom_call.1} parent=1 // pred_fallthru
      _
    // Predicated region
    $region26: #{tpu_custom_call.1} parent=1 // pred_check
      _
    $region27: #{tpu_custom_call.1} parent=1 // pred_check_branch
      %86 = sbr.rel (0) target = $region29
    $region28: #{tpu_custom_call.1} parent=1 // pred_region
      %88 = vsyncadd [#allocation12], 0
      %s89 = sshll.u32 %s6, 4
      %s90 = int_to_ptr.hbm [resolvable:$true] %s89
      %s91 = sshll.u32 [#allocation11], 4
      %s92 = int_to_ptr.vmem [resolvable:$true] %s91
      %97 = dma.hbm_to_vmem [thread:$0]  %s90, 512, %s92, [#allocation12], 128, 128, 8
    $region29: #{tpu_custom_call.1} parent=1 // pred_fallthru
      _
    // Predicated region
    $region30: #{tpu_custom_call.1} parent=1 // pred_check
      _
    $region31: #{tpu_custom_call.1} parent=1 // pred_check_branch
      %99 = sbr.rel (0) target = $region33
    $region32: #{tpu_custom_call.1} parent=1 // pred_region
      %101 = vsyncadd [#allocation12], 0
      %s102 = sshll.u32 %s7, 4
      %s103 = int_to_ptr.hbm [resolvable:$true] %s102
      %s104 = sshll.u32 [#allocation13], 4
      %s105 = int_to_ptr.vmem [resolvable:$true] %s104
      %110 = dma.hbm_to_vmem [thread:$0]  %s103, 512, %s105, [#allocation12], 128, 128, 8
    $region33: #{tpu_custom_call.1} parent=1 // pred_fallthru
      _
    // Predicated region
    $region34: #{tpu_custom_call.1} parent=1 // pred_check
      _
    $region35: #{tpu_custom_call.1} parent=1 // pred_check_branch
      %112 = sbr.rel (0) target = $region37
    $region36: #{tpu_custom_call.1} parent=1 // pred_region
      %114 = dma.done [#allocation3], 256
    $region37: #{tpu_custom_call.1} parent=1 // pred_fallthru
      _
    // Predicated region
    $region38: #{tpu_custom_call.1} parent=1 // pred_check
      _
    $region39: #{tpu_custom_call.1} parent=1 // pred_check_branch
      %116 = sbr.rel (0) target = $region41
    $region40: #{tpu_custom_call.1} parent=1 // pred_region
      %118 = dma.done [#allocation6], 256
    $region41: #{tpu_custom_call.1} parent=1 // pred_fallthru
      _
    // Predicated region
    $region42: #{tpu_custom_call.1} parent=1 // pred_check
      _
    $region43: #{tpu_custom_call.1} parent=1 // pred_check_branch
      %120 = sbr.rel (0) target = $region45
    $region44: #{tpu_custom_call.1} parent=1 // pred_region
      %122 = dma.done [#allocation6], 256
    $region45: #{tpu_custom_call.1} parent=1 // pred_fallthru
      _
    // Predicated region
    $region46: #{tpu_custom_call.1} parent=1 // pred_check
      _
    $region47: #{tpu_custom_call.1} parent=1 // pred_check_branch
      %124 = sbr.rel (0) target = $region49
    $region48: #{tpu_custom_call.1} parent=1 // pred_region
      %126 = dma.done [#allocation9], 512
    $region49: #{tpu_custom_call.1} parent=1 // pred_fallthru
      _
    // Predicated region
    $region50: #{tpu_custom_call.1} parent=1 // pred_check
      _
    $region51: #{tpu_custom_call.1} parent=1 // pred_check_branch
      %128 = sbr.rel (0) target = $region53
    $region52: #{tpu_custom_call.1} parent=1 // pred_region
      %130 = dma.done [#allocation9], 512
    $region53: #{tpu_custom_call.1} parent=1 // pred_fallthru
      _
    // Predicated region
    $region54: #{tpu_custom_call.1} parent=1 // pred_check
      _
    $region55: #{tpu_custom_call.1} parent=1 // pred_check_branch
      %132 = sbr.rel (0) target = $region57
    $region56: #{tpu_custom_call.1} parent=1 // pred_region
      %134 = dma.done [#allocation12], 512
    $region57: #{tpu_custom_call.1} parent=1 // pred_fallthru
      _
    // Predicated region
    $region58: #{tpu_custom_call.1} parent=1 // pred_check
      _
    $region59: #{tpu_custom_call.1} parent=1 // pred_check_branch
      %136 = sbr.rel (0) target = $region61
    $region60: #{tpu_custom_call.1} parent=1 // pred_region
      %138 = dma.done [#allocation12], 512
    $region61: #{tpu_custom_call.1} parent=1 // pred_fallthru
      _
    %v139 = vld [vmem:[#allocation2] sm:$0xff]
    %v140 = vld [vmem:[#allocation2 + $0x8] sm:$0xff]
    %v141 = vld [vmem:[#allocation5] sm:$0xff]
    %v142 = vld [vmem:[#allocation5 + $0x8] sm:$0xff]
    %v143 = vld [vmem:[#allocation7] sm:$0xff]
    %v144 = vld [vmem:[#allocation7 + $0x8] sm:$0xff]
    %v145 = vld [vmem:[#allocation8] sm:$0xff]
    %v146 = vld [vmem:[#allocation8 + $0x8] sm:$0xff]
    %v147 = vld [vmem:[#allocation8 + $0x10] sm:$0xff]
    %v148 = vld [vmem:[#allocation8 + $0x18] sm:$0xff]
    %vm149 = vcmask 261120
    %v151 = vsel %vm149, %v139, 0
    %v154 = vsel %vm149, %v140, 0
    %156 = vmatpush.msra.mxu0 0.0
    %157 = vmatpush.msra.mxu0 0.0
    %158 = vmatpush.msra.mxu0 0.0
    %159 = vmatpush.msra.mxu0 0.0
    %160 = vmatpush.msra.mxu0 0.0
    %161 = vmatpush.msra.mxu0 0.0
    %162 = vmatpush.msra.mxu0 0.0
    %163 = vmatpush.msra.mxu0 0.0
    %164 = vmatpush.msra.mxu0 0.0
    %165 = vmatpush.msra.mxu0 0.0
    %166 = vmatpush.msra.mxu0 0.0
    %167 = vmatpush.msra.mxu0 0.0
    %168 = vmatpush.msra.mxu0 %v148
    %169 = vmatpush.msra.mxu0 %v147
    %170 = vmatpush.msra.mxu0 %v146
    %171 = vmatpush.msra.mxu0 %v145
    %172 = vmatmul.f32.gmra.mxu0 %v151
    %v173 = vpop.f32.mrf.mxu0
    %v174 = vadd.f32 0.0, %v173
    %175 = vmatmul.f32.gmra.mxu0 %v154
    %v176 = vpop.f32.mrf.mxu0
    %v177 = vadd.f32 0.0, %v176
    %178 = vdwg.mxu0
    %v179 = vmul.f32 %v174, 0.35355338
    %v180 = vmul.f32 %v177, 0.35355338
    %v181 = vld [vmem:[#allocation10] sm:$0xff]
    %v182 = vld [vmem:[#allocation10 + $0x8] sm:$0xff]
    %v183 = vld [vmem:[#allocation10 + $0x10] sm:$0xff]
    %v184 = vld [vmem:[#allocation10 + $0x18] sm:$0xff]
    %v186 = vsel %vm149, %v141, 0
    %v189 = vsel %vm149, %v142, 0
    %191 = vmatpush.msra.mxu0 0.0
    %192 = vmatpush.msra.mxu0 0.0
    %193 = vmatpush.msra.mxu0 0.0
    %194 = vmatpush.msra.mxu0 0.0
    %195 = vmatpush.msra.mxu0 0.0
    %196 = vmatpush.msra.mxu0 0.0
    %197 = vmatpush.msra.mxu0 0.0
    %198 = vmatpush.msra.mxu0 0.0
    %199 = vmatpush.msra.mxu0 0.0
    %200 = vmatpush.msra.mxu0 0.0
    %201 = vmatpush.msra.mxu0 0.0
    %202 = vmatpush.msra.mxu0 0.0
    %203 = vmatpush.msra.mxu0 %v184
    %204 = vmatpush.msra.mxu0 %v183
    %205 = vmatpush.msra.mxu0 %v182
    %206 = vmatpush.msra.mxu0 %v181
    %207 = vmatmul.f32.gmra.mxu0 %v186
    %v208 = vpop.f32.mrf.mxu0
    %v209 = vadd.f32 0.0, %v208
    %210 = vmatmul.f32.gmra.mxu0 %v189
    %v211 = vpop.f32.mrf.mxu0
    %v212 = vadd.f32 0.0, %v211
    %213 = vdwg.mxu0
    %v214 = vld [vmem:[#allocation11] sm:$0xff]
    %v215 = vld [vmem:[#allocation11 + $0x8] sm:$0xff]
    %v216 = vld [vmem:[#allocation11 + $0x10] sm:$0xff]
    %v217 = vld [vmem:[#allocation11 + $0x18] sm:$0xff]
    %v219 = vsel %vm149, %v143, 0
    %v222 = vsel %vm149, %v144, 0
    %224 = vmatpush.msra.mxu0 0.0
    %225 = vmatpush.msra.mxu0 0.0
    %226 = vmatpush.msra.mxu0 0.0
    %227 = vmatpush.msra.mxu0 0.0
    %228 = vmatpush.msra.mxu0 0.0
    %229 = vmatpush.msra.mxu0 0.0
    %230 = vmatpush.msra.mxu0 0.0
    %231 = vmatpush.msra.mxu0 0.0
    %232 = vmatpush.msra.mxu0 0.0
    %233 = vmatpush.msra.mxu0 0.0
    %234 = vmatpush.msra.mxu0 0.0
    %235 = vmatpush.msra.mxu0 0.0
    %236 = vmatpush.msra.mxu0 %v217
    %237 = vmatpush.msra.mxu0 %v216
    %238 = vmatpush.msra.mxu0 %v215
    %239 = vmatpush.msra.mxu0 %v214
    %240 = vmatmul.f32.gmra.mxu0 %v219
    %v241 = vpop.f32.mrf.mxu0
    %v242 = vadd.f32 0.0, %v241
    %243 = vmatmul.f32.gmra.mxu0 %v222
    %v244 = vpop.f32.mrf.mxu0
    %v245 = vadd.f32 0.0, %v244
    %246 = vdwg.mxu0
    %v247 = vld [vmem:[%s3] sm:$0x3]
    %v248 = vlaneseq
    %v249 = vand.u32 %v248, 127
    %v250 = vrot.slane %v247, 1
    %v251 = vperm.slane %v247, 0
    %v252 = vperm.slane %v250, 0
    %253 = vset.pattern.permute.xlu0 0
    %254 = vperm.xlu0 %253, %v251
    %v255 = vpop.permute.xlu0 %254
    %256 = vset.pattern.permute.xlu0 0
    %257 = vperm.xlu0 %256, %v252
    %v258 = vpop.permute.xlu0 %257
    %vm259 = vcmp.lt.s32.totalorder %v249, %v255
    %vm260 = vcmp.lt.s32.totalorder %v249, %v258
    %vm261 = vcmask 64512
    %v263 = vsel %vm261, %v179, 0
    %v266 = vsel %vm261, %v209, 0
    %268 = vmatpush.xpose.msra.mxu0 0.0
    %269 = vmatpush.xpose.msra.mxu0 0.0
    %270 = vmatpush.xpose.msra.mxu0 0.0
    %271 = vmatpush.xpose.msra.mxu0 0.0
    %272 = vmatpush.xpose.msra.mxu0 0.0
    %273 = vmatpush.xpose.msra.mxu0 0.0
    %274 = vmatpush.xpose.msra.mxu0 0.0
    %275 = vmatpush.xpose.msra.mxu0 0.0
    %276 = vmatpush.xpose.msra.mxu0 0.0
    %277 = vmatpush.xpose.msra.mxu0 0.0
    %278 = vmatpush.xpose.msra.mxu0 0.0
    %279 = vmatpush.xpose.msra.mxu0 0.0
    %280 = vmatpush.xpose.msra.mxu0 0.0
    %281 = vmatpush.xpose.msra.mxu0 0.0
    %282 = vmatpush.xpose.msra.mxu0 0.0
    %283 = vmatpush.xpose.msra.mxu0 %v266
    %284 = vmatmul.f32.gmra.mxu0 %v263
    %v285 = vpop.f32.mrf.mxu0
    %v286 = vadd.f32 0.0, %v285
    %287 = vdwg.mxu0
    %v289 = vsel %vm261, %v180, 0
    %v292 = vsel %vm261, %v212, 0
    %294 = vmatpush.xpose.msra.mxu0 0.0
    %295 = vmatpush.xpose.msra.mxu0 0.0
    %296 = vmatpush.xpose.msra.mxu0 0.0
    %297 = vmatpush.xpose.msra.mxu0 0.0
    %298 = vmatpush.xpose.msra.mxu0 0.0
    %299 = vmatpush.xpose.msra.mxu0 0.0
    %300 = vmatpush.xpose.msra.mxu0 0.0
    %301 = vmatpush.xpose.msra.mxu0 0.0
    %302 = vmatpush.xpose.msra.mxu0 0.0
    %303 = vmatpush.xpose.msra.mxu0 0.0
    %304 = vmatpush.xpose.msra.mxu0 0.0
    %305 = vmatpush.xpose.msra.mxu0 0.0
    %306 = vmatpush.xpose.msra.mxu0 0.0
    %307 = vmatpush.xpose.msra.mxu0 0.0
    %308 = vmatpush.xpose.msra.mxu0 0.0
    %309 = vmatpush.xpose.msra.mxu0 %v292
    %310 = vmatmul.f32.gmra.mxu0 %v289
    %v311 = vpop.f32.mrf.mxu0
    %v312 = vadd.f32 0.0, %v311
    %313 = vdwg.mxu0
    %v314 = vsel %vm259, %v286, -1000000.0
    %v315 = vsel %vm260, %v312, -1000000.0
    %v316 = vsel %vm261, %v314, -inf
    %317 = vmax.xlane.f32.xlu0 %v316
    %v318 = vpop.xlane.xlu0 %317
    %v319 = vsel %vm261, %v315, -inf
    %320 = vmax.xlane.f32.xlu0 %v319
    %v321 = vpop.xlane.xlu0 %320
    %v322 = vsub.f32 %v314, %v318
    %v323 = vsub.f32 %v315, %v321
    %v324 = vmul.f32 %v322, 1.442695
    %v325 = vpow.pop %v324
    %v326 = vmul.f32 %v323, 1.442695
    %v327 = vpow.pop %v326
    %v328 = vsel %vm261, %v325, 0.0
    %329 = vadd.xlane.f32.xlu0 %v328
    %v330 = vpop.xlane.xlu0 %329
    %v331 = vsel %vm261, %v327, 0.0
    %332 = vadd.xlane.f32.xlu0 %v331
    %v333 = vpop.xlane.xlu0 %332
    %v334 = vrcp.pop %v330
    %v335 = vrcp.pop %v333
    %v336 = vmul.f32 %v325, %v334
    %v337 = vmul.f32 %v327, %v335
    %v339 = vsel %vm261, %v336, 0
    %341 = vmatpush.msra.mxu0 0.0
    %342 = vmatpush.msra.mxu0 0.0
    %343 = vmatpush.msra.mxu0 0.0
    %344 = vmatpush.msra.mxu0 0.0
    %345 = vmatpush.msra.mxu0 0.0
    %346 = vmatpush.msra.mxu0 0.0
    %347 = vmatpush.msra.mxu0 0.0
    %348 = vmatpush.msra.mxu0 0.0
    %349 = vmatpush.msra.mxu0 0.0
    %350 = vmatpush.msra.mxu0 0.0
    %351 = vmatpush.msra.mxu0 0.0
    %352 = vmatpush.msra.mxu0 0.0
    %353 = vmatpush.msra.mxu0 0.0
    %354 = vmatpush.msra.mxu0 0.0
    %355 = vmatpush.msra.mxu0 0.0
    %356 = vmatpush.msra.mxu0 %v242
    %357 = vmatmul.f32.gmra.mxu0 %v339
    %v358 = vpop.f32.mrf.mxu0
    %v359 = vadd.f32 0.0, %v358
    %360 = vdwg.mxu0
    %v362 = vsel %vm261, %v337, 0
    %364 = vmatpush.msra.mxu0 0.0
    %365 = vmatpush.msra.mxu0 0.0
    %366 = vmatpush.msra.mxu0 0.0
    %367 = vmatpush.msra.mxu0 0.0
    %368 = vmatpush.msra.mxu0 0.0
    %369 = vmatpush.msra.mxu0 0.0
    %370 = vmatpush.msra.mxu0 0.0
    %371 = vmatpush.msra.mxu0 0.0
    %372 = vmatpush.msra.mxu0 0.0
    %373 = vmatpush.msra.mxu0 0.0
    %374 = vmatpush.msra.mxu0 0.0
    %375 = vmatpush.msra.mxu0 0.0
    %376 = vmatpush.msra.mxu0 0.0
    %377 = vmatpush.msra.mxu0 0.0
    %378 = vmatpush.msra.mxu0 0.0
    %379 = vmatpush.msra.mxu0 %v245
    %380 = vmatmul.f32.gmra.mxu0 %v362
    %v381 = vpop.f32.mrf.mxu0
    %v382 = vadd.f32 0.0, %v381
    %383 = vdwg.mxu0
    %384 = vrot.lane.b32.xlu0 %v179, 120
    %v385 = vpop.permute.xlu0 %384
    %386 = vrot.lane.b32.xlu0 %v209, 120
    %v387 = vpop.permute.xlu0 %386
    %v388 = vsel %vm261, %v385, 0
    %v390 = vsel %vm261, %v387, 0
    %392 = vmatpush.xpose.msra.mxu0 0.0
    %393 = vmatpush.xpose.msra.mxu0 0.0
    %394 = vmatpush.xpose.msra.mxu0 0.0
    %395 = vmatpush.xpose.msra.mxu0 0.0
    %396 = vmatpush.xpose.msra.mxu0 0.0
    %397 = vmatpush.xpose.msra.mxu0 0.0
    %398 = vmatpush.xpose.msra.mxu0 0.0
    %399 = vmatpush.xpose.msra.mxu0 0.0
    %400 = vmatpush.xpose.msra.mxu0 0.0
    %401 = vmatpush.xpose.msra.mxu0 0.0
    %402 = vmatpush.xpose.msra.mxu0 0.0
    %403 = vmatpush.xpose.msra.mxu0 0.0
    %404 = vmatpush.xpose.msra.mxu0 0.0
    %405 = vmatpush.xpose.msra.mxu0 0.0
    %406 = vmatpush.xpose.msra.mxu0 0.0
    %407 = vmatpush.xpose.msra.mxu0 %v390
    %408 = vmatmul.f32.gmra.mxu0 %v388
    %v409 = vpop.f32.mrf.mxu0
    %v410 = vadd.f32 0.0, %v409
    %411 = vdwg.mxu0
    %412 = vrot.lane.b32.xlu0 %v180, 120
    %v413 = vpop.permute.xlu0 %412
    %414 = vrot.lane.b32.xlu0 %v212, 120
    %v415 = vpop.permute.xlu0 %414
    %v416 = vsel %vm261, %v413, 0
    %v418 = vsel %vm261, %v415, 0
    %420 = vmatpush.xpose.msra.mxu0 0.0
    %421 = vmatpush.xpose.msra.mxu0 0.0
    %422 = vmatpush.xpose.msra.mxu0 0.0
    %423 = vmatpush.xpose.msra.mxu0 0.0
    %424 = vmatpush.xpose.msra.mxu0 0.0
    %425 = vmatpush.xpose.msra.mxu0 0.0
    %426 = vmatpush.xpose.msra.mxu0 0.0
    %427 = vmatpush.xpose.msra.mxu0 0.0
    %428 = vmatpush.xpose.msra.mxu0 0.0
    %429 = vmatpush.xpose.msra.mxu0 0.0
    %430 = vmatpush.xpose.msra.mxu0 0.0
    %431 = vmatpush.xpose.msra.mxu0 0.0
    %432 = vmatpush.xpose.msra.mxu0 0.0
    %433 = vmatpush.xpose.msra.mxu0 0.0
    %434 = vmatpush.xpose.msra.mxu0 0.0
    %435 = vmatpush.xpose.msra.mxu0 %v418
    %436 = vmatmul.f32.gmra.mxu0 %v416
    %v437 = vpop.f32.mrf.mxu0
    %v438 = vadd.f32 0.0, %v437
    %439 = vdwg.mxu0
    %v440 = vsel %vm259, %v410, -1000000.0
    %v441 = vsel %vm260, %v438, -1000000.0
    %v442 = vsel %vm261, %v440, -inf
    %443 = vmax.xlane.f32.xlu0 %v442
    %v444 = vpop.xlane.xlu0 %443
    %v445 = vsel %vm261, %v441, -inf
    %446 = vmax.xlane.f32.xlu0 %v445
    %v447 = vpop.xlane.xlu0 %446
    %v448 = vsub.f32 %v440, %v444
    %v449 = vsub.f32 %v441, %v447
    %v450 = vmul.f32 %v448, 1.442695
    %v451 = vpow.pop %v450
    %v452 = vmul.f32 %v449, 1.442695
    %v453 = vpow.pop %v452
    %v454 = vsel %vm261, %v451, 0.0
    %455 = vadd.xlane.f32.xlu0 %v454
    %v456 = vpop.xlane.xlu0 %455
    %v457 = vsel %vm261, %v453, 0.0
    %458 = vadd.xlane.f32.xlu0 %v457
    %v459 = vpop.xlane.xlu0 %458
    %v460 = vrcp.pop %v456
    %v461 = vrcp.pop %v459
    %v462 = vmul.f32 %v451, %v460
    %v463 = vmul.f32 %v453, %v461
    %465 = vrot.lane.b32.xlu0 %v242, 120
    %v466 = vpop.permute.xlu0 %465
    %v469 = vsel %vm261, %v462, 0
    %471 = vmatpush.msra.mxu0 0.0
    %472 = vmatpush.msra.mxu0 0.0
    %473 = vmatpush.msra.mxu0 0.0
    %474 = vmatpush.msra.mxu0 0.0
    %475 = vmatpush.msra.mxu0 0.0
    %476 = vmatpush.msra.mxu0 0.0
    %477 = vmatpush.msra.mxu0 0.0
    %478 = vmatpush.msra.mxu0 0.0
    %479 = vmatpush.msra.mxu0 0.0
    %480 = vmatpush.msra.mxu0 0.0
    %481 = vmatpush.msra.mxu0 0.0
    %482 = vmatpush.msra.mxu0 0.0
    %483 = vmatpush.msra.mxu0 0.0
    %484 = vmatpush.msra.mxu0 0.0
    %485 = vmatpush.msra.mxu0 0.0
    %486 = vmatpush.msra.mxu0 %v466
    %487 = vmatmul.f32.gmra.mxu0 %v469
    %v488 = vpop.f32.mrf.mxu0
    %v489 = vadd.f32 0.0, %v488
    %490 = vdwg.mxu0
    %492 = vrot.lane.b32.xlu0 %v245, 120
    %v493 = vpop.permute.xlu0 %492
    %v496 = vsel %vm261, %v463, 0
    %498 = vmatpush.msra.mxu0 0.0
    %499 = vmatpush.msra.mxu0 0.0
    %500 = vmatpush.msra.mxu0 0.0
    %501 = vmatpush.msra.mxu0 0.0
    %502 = vmatpush.msra.mxu0 0.0
    %503 = vmatpush.msra.mxu0 0.0
    %504 = vmatpush.msra.mxu0 0.0
    %505 = vmatpush.msra.mxu0 0.0
    %506 = vmatpush.msra.mxu0 0.0
    %507 = vmatpush.msra.mxu0 0.0
    %508 = vmatpush.msra.mxu0 0.0
    %509 = vmatpush.msra.mxu0 0.0
    %510 = vmatpush.msra.mxu0 0.0
    %511 = vmatpush.msra.mxu0 0.0
    %512 = vmatpush.msra.mxu0 0.0
    %513 = vmatpush.msra.mxu0 %v493
    %514 = vmatmul.f32.gmra.mxu0 %v496
    %v515 = vpop.f32.mrf.mxu0
    %v516 = vadd.f32 0.0, %v515
    %517 = vdwg.mxu0
    %518 = vrot.lane.b32.xlu0 %v179, 112
    %v519 = vpop.permute.xlu0 %518
    %520 = vrot.lane.b32.xlu0 %v209, 112
    %v521 = vpop.permute.xlu0 %520
    %v522 = vsel %vm261, %v519, 0
    %v524 = vsel %vm261, %v521, 0
    %526 = vmatpush.xpose.msra.mxu0 0.0
    %527 = vmatpush.xpose.msra.mxu0 0.0
    %528 = vmatpush.xpose.msra.mxu0 0.0
    %529 = vmatpush.xpose.msra.mxu0 0.0
    %530 = vmatpush.xpose.msra.mxu0 0.0
    %531 = vmatpush.xpose.msra.mxu0 0.0
    %532 = vmatpush.xpose.msra.mxu0 0.0
    %533 = vmatpush.xpose.msra.mxu0 0.0
    %534 = vmatpush.xpose.msra.mxu0 0.0
    %535 = vmatpush.xpose.msra.mxu0 0.0
    %536 = vmatpush.xpose.msra.mxu0 0.0
    %537 = vmatpush.xpose.msra.mxu0 0.0
    %538 = vmatpush.xpose.msra.mxu0 0.0
    %539 = vmatpush.xpose.msra.mxu0 0.0
    %540 = vmatpush.xpose.msra.mxu0 0.0
    %541 = vmatpush.xpose.msra.mxu0 %v524
    %542 = vmatmul.f32.gmra.mxu0 %v522
    %v543 = vpop.f32.mrf.mxu0
    %v544 = vadd.f32 0.0, %v543
    %545 = vdwg.mxu0
    %546 = vrot.lane.b32.xlu0 %v180, 112
    %v547 = vpop.permute.xlu0 %546
    %548 = vrot.lane.b32.xlu0 %v212, 112
    %v549 = vpop.permute.xlu0 %548
    %v550 = vsel %vm261, %v547, 0
    %v552 = vsel %vm261, %v549, 0
    %554 = vmatpush.xpose.msra.mxu0 0.0
    %555 = vmatpush.xpose.msra.mxu0 0.0
    %556 = vmatpush.xpose.msra.mxu0 0.0
    %557 = vmatpush.xpose.msra.mxu0 0.0
    %558 = vmatpush.xpose.msra.mxu0 0.0
    %559 = vmatpush.xpose.msra.mxu0 0.0
    %560 = vmatpush.xpose.msra.mxu0 0.0
    %561 = vmatpush.xpose.msra.mxu0 0.0
    %562 = vmatpush.xpose.msra.mxu0 0.0
    %563 = vmatpush.xpose.msra.mxu0 0.0
    %564 = vmatpush.xpose.msra.mxu0 0.0
    %565 = vmatpush.xpose.msra.mxu0 0.0
    %566 = vmatpush.xpose.msra.mxu0 0.0
    %567 = vmatpush.xpose.msra.mxu0 0.0
    %568 = vmatpush.xpose.msra.mxu0 0.0
    %569 = vmatpush.xpose.msra.mxu0 %v552
    %570 = vmatmul.f32.gmra.mxu0 %v550
    %v571 = vpop.f32.mrf.mxu0
    %v572 = vadd.f32 0.0, %v571
    %573 = vdwg.mxu0
    %v574 = vsel %vm259, %v544, -1000000.0
    %v575 = vsel %vm260, %v572, -1000000.0
    %v576 = vsel %vm261, %v574, -inf
    %577 = vmax.xlane.f32.xlu0 %v576
    %v578 = vpop.xlane.xlu0 %577
    %v579 = vsel %vm261, %v575, -inf
    %580 = vmax.xlane.f32.xlu0 %v579
    %v581 = vpop.xlane.xlu0 %580
    %v582 = vsub.f32 %v574, %v578
    %v583 = vsub.f32 %v575, %v581
    %v584 = vmul.f32 %v582, 1.442695
    %v585 = vpow.pop %v584
    %v586 = vmul.f32 %v583, 1.442695
    %v587 = vpow.pop %v586
    %v588 = vsel %vm261, %v585, 0.0
    %589 = vadd.xlane.f32.xlu0 %v588
    %v590 = vpop.xlane.xlu0 %589
    %v591 = vsel %vm261, %v587, 0.0
    %592 = vadd.xlane.f32.xlu0 %v591
    %v593 = vpop.xlane.xlu0 %592
    %v594 = vrcp.pop %v590
    %v595 = vrcp.pop %v593
    %v596 = vmul.f32 %v585, %v594
    %v597 = vmul.f32 %v587, %v595
    %598 = vrot.lane.b32.xlu0 %v242, 112
    %v599 = vpop.permute.xlu0 %598
    %v602 = vsel %vm261, %v596, 0
    %604 = vmatpush.msra.mxu0 0.0
    %605 = vmatpush.msra.mxu0 0.0
    %606 = vmatpush.msra.mxu0 0.0
    %607 = vmatpush.msra.mxu0 0.0
    %608 = vmatpush.msra.mxu0 0.0
    %609 = vmatpush.msra.mxu0 0.0
    %610 = vmatpush.msra.mxu0 0.0
    %611 = vmatpush.msra.mxu0 0.0
    %612 = vmatpush.msra.mxu0 0.0
    %613 = vmatpush.msra.mxu0 0.0
    %614 = vmatpush.msra.mxu0 0.0
    %615 = vmatpush.msra.mxu0 0.0
    %616 = vmatpush.msra.mxu0 0.0
    %617 = vmatpush.msra.mxu0 0.0
    %618 = vmatpush.msra.mxu0 0.0
    %619 = vmatpush.msra.mxu0 %v599
    %620 = vmatmul.f32.gmra.mxu0 %v602
    %v621 = vpop.f32.mrf.mxu0
    %v622 = vadd.f32 0.0, %v621
    %623 = vdwg.mxu0
    %624 = vrot.lane.b32.xlu0 %v245, 112
    %v625 = vpop.permute.xlu0 %624
    %v628 = vsel %vm261, %v597, 0
    %630 = vmatpush.msra.mxu0 0.0
    %631 = vmatpush.msra.mxu0 0.0
    %632 = vmatpush.msra.mxu0 0.0
    %633 = vmatpush.msra.mxu0 0.0
    %634 = vmatpush.msra.mxu0 0.0
    %635 = vmatpush.msra.mxu0 0.0
    %636 = vmatpush.msra.mxu0 0.0
    %637 = vmatpush.msra.mxu0 0.0
    %638 = vmatpush.msra.mxu0 0.0
    %639 = vmatpush.msra.mxu0 0.0
    %640 = vmatpush.msra.mxu0 0.0
    %641 = vmatpush.msra.mxu0 0.0
    %642 = vmatpush.msra.mxu0 0.0
    %643 = vmatpush.msra.mxu0 0.0
    %644 = vmatpush.msra.mxu0 0.0
    %645 = vmatpush.msra.mxu0 %v625
    %646 = vmatmul.f32.gmra.mxu0 %v628
    %v647 = vpop.f32.mrf.mxu0
    %v648 = vadd.f32 0.0, %v647
    %649 = vdwg.mxu0
    %650 = vrot.lane.b32.xlu0 %v179, 104
    %v651 = vpop.permute.xlu0 %650
    %652 = vrot.lane.b32.xlu0 %v209, 104
    %v653 = vpop.permute.xlu0 %652
    %v654 = vsel %vm261, %v651, 0
    %v656 = vsel %vm261, %v653, 0
    %658 = vmatpush.xpose.msra.mxu0 0.0
    %659 = vmatpush.xpose.msra.mxu0 0.0
    %660 = vmatpush.xpose.msra.mxu0 0.0
    %661 = vmatpush.xpose.msra.mxu0 0.0
    %662 = vmatpush.xpose.msra.mxu0 0.0
    %663 = vmatpush.xpose.msra.mxu0 0.0
    %664 = vmatpush.xpose.msra.mxu0 0.0
    %665 = vmatpush.xpose.msra.mxu0 0.0
    %666 = vmatpush.xpose.msra.mxu0 0.0
    %667 = vmatpush.xpose.msra.mxu0 0.0
    %668 = vmatpush.xpose.msra.mxu0 0.0
    %669 = vmatpush.xpose.msra.mxu0 0.0
    %670 = vmatpush.xpose.msra.mxu0 0.0
    %671 = vmatpush.xpose.msra.mxu0 0.0
    %672 = vmatpush.xpose.msra.mxu0 0.0
    %673 = vmatpush.xpose.msra.mxu0 %v656
    %674 = vmatmul.f32.gmra.mxu0 %v654
    %v675 = vpop.f32.mrf.mxu0
    %v676 = vadd.f32 0.0, %v675
    %677 = vdwg.mxu0
    %678 = vrot.lane.b32.xlu0 %v180, 104
    %v679 = vpop.permute.xlu0 %678
    %680 = vrot.lane.b32.xlu0 %v212, 104
    %v681 = vpop.permute.xlu0 %680
    %v682 = vsel %vm261, %v679, 0
    %v684 = vsel %vm261, %v681, 0
    %686 = vmatpush.xpose.msra.mxu0 0.0
    %687 = vmatpush.xpose.msra.mxu0 0.0
    %688 = vmatpush.xpose.msra.mxu0 0.0
    %689 = vmatpush.xpose.msra.mxu0 0.0
    %690 = vmatpush.xpose.msra.mxu0 0.0
    %691 = vmatpush.xpose.msra.mxu0 0.0
    %692 = vmatpush.xpose.msra.mxu0 0.0
    %693 = vmatpush.xpose.msra.mxu0 0.0
    %694 = vmatpush.xpose.msra.mxu0 0.0
    %695 = vmatpush.xpose.msra.mxu0 0.0
    %696 = vmatpush.xpose.msra.mxu0 0.0
    %697 = vmatpush.xpose.msra.mxu0 0.0
    %698 = vmatpush.xpose.msra.mxu0 0.0
    %699 = vmatpush.xpose.msra.mxu0 0.0
    %700 = vmatpush.xpose.msra.mxu0 0.0
    %701 = vmatpush.xpose.msra.mxu0 %v684
    %702 = vmatmul.f32.gmra.mxu0 %v682
    %v703 = vpop.f32.mrf.mxu0
    %v704 = vadd.f32 0.0, %v703
    %705 = vdwg.mxu0
    %v706 = vsel %vm259, %v676, -1000000.0
    %v707 = vsel %vm260, %v704, -1000000.0
    %v708 = vsel %vm261, %v706, -inf
    %709 = vmax.xlane.f32.xlu0 %v708
    %v710 = vpop.xlane.xlu0 %709
    %v711 = vsel %vm261, %v707, -inf
    %712 = vmax.xlane.f32.xlu0 %v711
    %v713 = vpop.xlane.xlu0 %712
    %v714 = vsub.f32 %v706, %v710
    %v715 = vsub.f32 %v707, %v713
    %v716 = vmul.f32 %v714, 1.442695
    %v717 = vpow.pop %v716
    %v718 = vmul.f32 %v715, 1.442695
    %v719 = vpow.pop %v718
    %v720 = vsel %vm261, %v717, 0.0
    %721 = vadd.xlane.f32.xlu0 %v720
    %v722 = vpop.xlane.xlu0 %721
    %v723 = vsel %vm261, %v719, 0.0
    %724 = vadd.xlane.f32.xlu0 %v723
    %v725 = vpop.xlane.xlu0 %724
    %v726 = vrcp.pop %v722
    %v727 = vrcp.pop %v725
    %v728 = vmul.f32 %v717, %v726
    %v729 = vmul.f32 %v719, %v727
    %730 = vrot.lane.b32.xlu0 %v242, 104
    %v731 = vpop.permute.xlu0 %730
    %v734 = vsel %vm261, %v728, 0
    %736 = vmatpush.msra.mxu0 0.0
    %737 = vmatpush.msra.mxu0 0.0
    %738 = vmatpush.msra.mxu0 0.0
    %739 = vmatpush.msra.mxu0 0.0
    %740 = vmatpush.msra.mxu0 0.0
    %741 = vmatpush.msra.mxu0 0.0
    %742 = vmatpush.msra.mxu0 0.0
    %743 = vmatpush.msra.mxu0 0.0
    %744 = vmatpush.msra.mxu0 0.0
    %745 = vmatpush.msra.mxu0 0.0
    %746 = vmatpush.msra.mxu0 0.0
    %747 = vmatpush.msra.mxu0 0.0
    %748 = vmatpush.msra.mxu0 0.0
    %749 = vmatpush.msra.mxu0 0.0
    %750 = vmatpush.msra.mxu0 0.0
    %751 = vmatpush.msra.mxu0 %v731
    %752 = vmatmul.f32.gmra.mxu0 %v734
    %v753 = vpop.f32.mrf.mxu0
    %v754 = vadd.f32 0.0, %v753
    %755 = vdwg.mxu0
    %756 = vrot.lane.b32.xlu0 %v245, 104
    %v757 = vpop.permute.xlu0 %756
    %v760 = vsel %vm261, %v729, 0
    %762 = vmatpush.msra.mxu0 0.0
    %763 = vmatpush.msra.mxu0 0.0
    %764 = vmatpush.msra.mxu0 0.0
    %765 = vmatpush.msra.mxu0 0.0
    %766 = vmatpush.msra.mxu0 0.0
    %767 = vmatpush.msra.mxu0 0.0
    %768 = vmatpush.msra.mxu0 0.0
    %769 = vmatpush.msra.mxu0 0.0
    %770 = vmatpush.msra.mxu0 0.0
    %771 = vmatpush.msra.mxu0 0.0
    %772 = vmatpush.msra.mxu0 0.0
    %773 = vmatpush.msra.mxu0 0.0
    %774 = vmatpush.msra.mxu0 0.0
    %775 = vmatpush.msra.mxu0 0.0
    %776 = vmatpush.msra.mxu0 0.0
    %777 = vmatpush.msra.mxu0 %v757
    %778 = vmatmul.f32.gmra.mxu0 %v760
    %v779 = vpop.f32.mrf.mxu0
    %v780 = vadd.f32 0.0, %v779
    %781 = vdwg.mxu0
    %784 = vrot.lane.b32.xlu0 %v489, 8
    %v785 = vpop.permute.xlu0 %784
    %786 = vrot.lane.b32.xlu0 %v516, 8
    %v787 = vpop.permute.xlu0 %786
    %792 = vrot.lane.b32.xlu0 %v622, 16
    %v793 = vpop.permute.xlu0 %792
    %794 = vrot.lane.b32.xlu0 %v648, 16
    %v795 = vpop.permute.xlu0 %794
    %800 = vrot.lane.b32.xlu0 %v754, 24
    %v801 = vpop.permute.xlu0 %800
    %802 = vrot.lane.b32.xlu0 %v780, 24
    %v803 = vpop.permute.xlu0 %802
    %v806 = vsel %vm261, %v359, %v785
    %v807 = vsel %vm261, %v382, %v787
    %vm808 = vcmask 130048
    %v809 = vsel %vm808, %v806, %v793
    %v810 = vsel %vm808, %v807, %v795
    %vm811 = vcmask 195584
    %v812 = vsel %vm811, %v809, %v801
    %v813 = vsel %vm811, %v810, %v803
    %v814 = vld [vmem:[#allocation13] sm:$0xff]
    %v815 = vld [vmem:[#allocation13 + $0x8] sm:$0xff]
    %v816 = vld [vmem:[#allocation13 + $0x10] sm:$0xff]
    %v817 = vld [vmem:[#allocation13 + $0x18] sm:$0xff]
    %v819 = vsel %vm149, %v812, 0
    %v822 = vsel %vm149, %v813, 0
    %824 = vmatpush.msra.mxu0 0.0
    %825 = vmatpush.msra.mxu0 0.0
    %826 = vmatpush.msra.mxu0 0.0
    %827 = vmatpush.msra.mxu0 0.0
    %828 = vmatpush.msra.mxu0 0.0
    %829 = vmatpush.msra.mxu0 0.0
    %830 = vmatpush.msra.mxu0 0.0
    %831 = vmatpush.msra.mxu0 0.0
    %832 = vmatpush.msra.mxu0 0.0
    %833 = vmatpush.msra.mxu0 0.0
    %834 = vmatpush.msra.mxu0 0.0
    %835 = vmatpush.msra.mxu0 0.0
    %836 = vmatpush.msra.mxu0 %v817
    %837 = vmatpush.msra.mxu0 %v816
    %838 = vmatpush.msra.mxu0 %v815
    %839 = vmatpush.msra.mxu0 %v814
    %840 = vmatmul.f32.gmra.mxu0 %v819
    %v841 = vpop.f32.mrf.mxu0
    %v842 = vadd.f32 0.0, %v841
    %843 = vmatmul.f32.gmra.mxu0 %v822
    %v844 = vpop.f32.mrf.mxu0
    %v845 = vadd.f32 0.0, %v844
    %846 = vdwg.mxu0
    %847 = vst.msk [vmem:[#allocation14] sm:$0xff] %vm149, %v842
    %848 = vst.msk [vmem:[#allocation14 + $0x8] sm:$0xff] %vm149, %v845
    // Predicated region
    $region62: #{tpu_custom_call.1} parent=1 // pred_check
      _
    $region63: #{tpu_custom_call.1} parent=1 // pred_check_branch
      %850 = sbr.rel (0) target = $region65
    $region64: #{tpu_custom_call.1} parent=1 // pred_region
      %852 = vsyncadd [#allocation4], 0
      %s853 = sshll.u32 [#allocation14], 4
      %s854 = int_to_ptr.vmem [resolvable:$true] %s853
      %s855 = sshll.u32 %s8, 4
      %s856 = int_to_ptr.hbm [resolvable:$true] %s855
      %861 = dma.vmem_to_hbm [thread:$0]  %s854, 256, %s856, [#allocation4], 128, 128, 8
    $region65: #{tpu_custom_call.1} parent=1 // pred_fallthru
      _
    // Predicated region
    $region66: #{tpu_custom_call.1} parent=1 // pred_check
      _
    $region67: #{tpu_custom_call.1} parent=1 // pred_check_branch
      %863 = sbr.rel (0) target = $region69
    $region68: #{tpu_custom_call.1} parent=1 // pred_region
      %865 = dma.done [#allocation4], 256
    $region69: #{tpu_custom_call.1} parent=1 // pred_fallthru
      _
    %866 = vsyncpa [#allocation3], 1
    %867 = vsyncpa [#allocation6], 1
    %868 = vsyncpa [#allocation9], 1
    %869 = vsyncpa [#allocation12], 1
    %870 = vsyncpa [#allocation4], 1

</llo_original>
